<compile_context>
chip_gen: v7x
topology: tpu7x:2x2x1
jax: 0.10.0
libtpu: 0.0.40
codegen_flags: <defaults>
</compile_context>

<pallas_src>
import jax
import jax.numpy as jnp
from jax.experimental import pallas as pl
from jax.experimental.pallas import tpu as pltpu

BN_EPS = 1e-5


def _regression_tail_kernel(x_ref, w1_ref, b1_ref, w2_ref, b2_ref,
                            w3_ref, b3_ref, o_ref):
    x = x_ref[...]                                                   # (tn, F) bf16

    # fc[0..3]: Linear(F -> F//2) with BN folded in, ReLU, dropout = identity.
    h = jnp.dot(x, w1_ref[...], preferred_element_type=jnp.float32) + b1_ref[...]
    h = jnp.maximum(h, 0.0)

    # fc[4..7]: Linear(F//2 -> F//4) with BN folded in, ReLU, dropout = identity.
    h = jnp.dot(h.astype(jnp.bfloat16), w2_ref[...],
                preferred_element_type=jnp.float32) + b2_ref[...]
    h = jnp.maximum(h, 0.0)

    # out: Linear(F//4 -> 1).  (tn, 1) block -> tiny masked store, 128x less
    # HBM writeback than the old 128-lane padded layout.
    o_ref[...] = (
        jnp.dot(h.astype(jnp.bfloat16), w3_ref[...],
                preferred_element_type=jnp.float32) + b3_ref[...]
    )


def _round_up(v, m):
    return (v + m - 1) // m * m


def fold_params(p):
    """Fold BatchNorm running stats into the Linear weights/biases (one-time).

    The fold happens in f32; only the matmul weights are then cast to bf16
    (biases stay f32 for the f32 epilogue).
    """
    scale1 = p["g1"] * jax.lax.rsqrt(p["v1"] + BN_EPS)        # (1, h1), f32
    w1 = (p["w1"] * scale1).astype(jnp.bfloat16)              # per-output-col scale
    b1 = (p["b1"] - p["m1"]) * scale1 + p["be1"]

    scale2 = p["g2"] * jax.lax.rsqrt(p["v2"] + BN_EPS)        # (1, h2), f32
    w2 = (p["w2"] * scale2).astype(jnp.bfloat16)
    b2 = (p["b2"] - p["m2"]) * scale2 + p["be2"]

    w3 = p["w3"].astype(jnp.bfloat16)                         # (h2, 1)
    b3 = p["b3"]                                              # (1, 1), f32

    return dict(w1=w1, b1=b1, w2=w2, b2=b2, w3=w3, b3=b3)


def regression_tail_forward(x, folded, *, block_n=1024):
    """x: (N, in_features) float32.  folded: output of fold_params()."""
    n, f = x.shape
    w1, b1 = folded["w1"], folded["b1"]
    w2, b2 = folded["w2"], folded["b2"]
    w3, b3 = folded["w3"], folded["b3"]
    h1 = w1.shape[1]
    h2 = w2.shape[1]

    # bf16 activations for the MXU (epilogue stays f32 inside the kernel).
    x = x.astype(jnp.bfloat16)

    # ---- batch-tile selection ----------------------------------------------
    n8 = _round_up(n, 8)
    tn = min(_round_up(block_n, 8), n8)
    # Cap so the grid has >= 2 steps when the batch allows it (v7x megacore).
    if n8 >= 16:
        tn = min(tn, _round_up((n8 + 1) // 2, 8))
    # Prefer a tile that divides n8 exactly (keeps padding to <= 7 rows and
    # usually avoids jnp.pad entirely); fall back to the big tile + padded
    # batch only for pathological batch sizes.
    t = tn
    while t > 8 and n8 % t != 0:
        t -= 8
    if t >= max(8, tn // 4):
        tn = t
    n_pad = _round_up(n8, tn)
    if n_pad != n:
        x = jnp.pad(x, ((0, n_pad - n), (0, 0)))
    grid = (n_pad // tn,)

    # ---- VMEM budget (footprint-derived, clamped to [32, 100] MiB) ----------
    est = (2 * tn * f * 2                       # x blocks (bf16, double-buffered)
           + (f * h1 + h1 * h2 + h2) * 2        # weights (bf16, single-buffered)
           + 8 * (h1 + h2 + 128) * 4            # biases (f32, sublane-padded)
           + 2 * tn * 128 * 4                   # out blocks (f32, lane-padded)
           + tn * (h1 + h2) * 4)                # f32 intermediates
    vmem_limit = int(min(100 * 2 ** 20, max(32 * 2 ** 20, 2 * est)))

    def resident(shape):
        nd = len(shape)
        # Constant index_map -> stays in VMEM; single buffer (no dead copy).
        return pl.BlockSpec(shape, lambda i, _nd=nd: (0,) * _nd,
                            pipeline_mode=pl.Buffered(1))

    out = pl.pallas_call(
        _regression_tail_kernel,
        out_shape=jax.ShapeDtypeStruct((n_pad, 1), jnp.float32),
        grid=grid,
        in_specs=[
            pl.BlockSpec((tn, f), lambda i: (i, 0)),   # x: batch-tiled, double-buffered
            resident((f, h1)), resident((1, h1)),      # folded Linear 1
            resident((h1, h2)), resident((1, h2)),     # folded Linear 2
            resident((h2, 1)), resident((1, 1)),       # Linear 3 (F/4 -> 1)
        ],
        out_specs=pl.BlockSpec((tn, 1), lambda i: (i, 0)),
        compiler_params=pltpu.CompilerParams(
            dimension_semantics=("parallel",),          # megacore sharding on v7x
            vmem_limit_bytes=vmem_limit,
        ),
    )(x, w1, b1, w2, b2, w3, b3)

    return out[:n]


def init_params(key, in_features):
    """Deterministic synthetic parameters matching RegressionTail.__init__ shapes."""
    h1 = in_features // 2
    h2 = in_features // 4
    ks = jax.random.split(key, 10)

    def lin(kw, kb, fan_in, fan_out):
        # PyTorch default init: U(-1/sqrt(fan_in), 1/sqrt(fan_in)).
        bound = 1.0 / jnp.sqrt(jnp.float32(fan_in))
        w = jax.random.uniform(kw, (fan_in, fan_out), jnp.float32, -bound, bound)
        b = jax.random.uniform(kb, (1, fan_out), jnp.float32, -bound, bound)
        return w, b

    w1, b1 = lin(ks[0], ks[1], in_features, h1)
    w2, b2 = lin(ks[2], ks[3], h1, h2)
    w3, b3 = lin(ks[4], ks[5], h2, 1)

    # BatchNorm params / running stats (non-trivial values to exercise the math).
    g1 = 1.0 + 0.1 * jax.random.normal(ks[6], (1, h1), jnp.float32)
    be1 = 0.1 * jax.random.normal(ks[7], (1, h1), jnp.float32)
    m1 = 0.05 * jax.random.normal(ks[8], (1, h1), jnp.float32)
    v1 = 1.0 + 0.1 * jax.random.uniform(ks[9], (1, h1), jnp.float32)

    ks2 = jax.random.split(ks[9], 4)
    g2 = 1.0 + 0.1 * jax.random.normal(ks2[0], (1, h2), jnp.float32)
    be2 = 0.1 * jax.random.normal(ks2[1], (1, h2), jnp.float32)
    m2 = 0.05 * jax.random.normal(ks2[2], (1, h2), jnp.float32)
    v2 = 1.0 + 0.1 * jax.random.uniform(ks2[3], (1, h2), jnp.float32)

    return dict(
        w1=w1, b1=b1, g1=g1, be1=be1, m1=m1, v1=v1,
        w2=w2, b2=b2, g2=g2, be2=be2, m2=m2, v2=v2,
        w3=w3, b3=b3,
    )


def reference_forward(x, p):
    """Pure-JAX f32 reference (un-folded BN, eval semantics)."""
    h = x @ p["w1"] + p["b1"]
    h = (h - p["m1"]) * (p["g1"] / jnp.sqrt(p["v1"] + BN_EPS)) + p["be1"]
    h = jnp.maximum(h, 0.0)
    h = h @ p["w2"] + p["b2"]
    h = (h - p["m2"]) * (p["g2"] / jnp.sqrt(p["v2"] + BN_EPS)) + p["be2"]
    h = jnp.maximum(h, 0.0)
    return h @ p["w3"] + p["b3"]


if __name__ == "__main__":
    key = jax.random.PRNGKey(0)
    kx, kp = jax.random.split(key)

    batch, in_features = 8, 32
    x = jax.random.normal(kx, (batch, in_features), jnp.float32)
    params = init_params(kp, in_features)
    folded = fold_params(params)

    out = regression_tail_forward(x, folded)
    out = jax.block_until_ready(out)

    ref = reference_forward(x, params)
    assert out.shape == (batch, 1), out.shape
    # Tolerance sized for bf16 matmul operands vs. the f32 reference.
    assert jnp.allclose(out, ref, atol=3e-2, rtol=3e-2), (out, ref)

    print("KERNEL_OK")
</pallas_src>

<mosaic_0001>
module attributes {stable_mosaic.version = 11 : i64} {
  func.func @_regression_tail_kernel(%arg0: i32, %arg1: memref<8x32xbf16, #tpu.memory_space<vmem>>, %arg2: memref<32x16xbf16, #tpu.memory_space<vmem>>, %arg3: memref<1x16xf32, #tpu.memory_space<vmem>>, %arg4: memref<16x8xbf16, #tpu.memory_space<vmem>>, %arg5: memref<1x8xf32, #tpu.memory_space<vmem>>, %arg6: memref<8x1xbf16, #tpu.memory_space<vmem>>, %arg7: memref<1x1xf32, #tpu.memory_space<vmem>>, %arg8: memref<8x1xf32, #tpu.memory_space<vmem>>) attributes {dimension_semantics = [#tpu.dimension_semantics<parallel>], iteration_bounds = array<i64: 1>, scalar_prefetch = 0 : i64, scratch_operands = 0 : i64, tpu.core_type = #tpu.core_type<tc>, window_params = [{transform_indices = @transform_0, window_bounds = array<i64: 8, 32>}, {pipeline_mode = #tpu.pipeline_mode<synchronous>, transform_indices = @transform_1, window_bounds = array<i64: 32, 16>}, {pipeline_mode = #tpu.pipeline_mode<synchronous>, transform_indices = @transform_2, window_bounds = array<i64: 1, 16>}, {pipeline_mode = #tpu.pipeline_mode<synchronous>, transform_indices = @transform_3, window_bounds = array<i64: 16, 8>}, {pipeline_mode = #tpu.pipeline_mode<synchronous>, transform_indices = @transform_4, window_bounds = array<i64: 1, 8>}, {pipeline_mode = #tpu.pipeline_mode<synchronous>, transform_indices = @transform_5, window_bounds = array<i64: 8, 1>}, {pipeline_mode = #tpu.pipeline_mode<synchronous>, transform_indices = @transform_6, window_bounds = array<i64: 1, 1>}, {transform_indices = @transform_7, window_bounds = array<i64: 8, 1>}]} {
    %c0 = arith.constant 0 : index
    %c0_0 = arith.constant 0 : index
    %0 = vector.load %arg1[%c0, %c0_0] : memref<8x32xbf16, #tpu.memory_space<vmem>>, vector<8x32xbf16>
    %c0_1 = arith.constant 0 : index
    %c0_2 = arith.constant 0 : index
    %1 = vector.load %arg2[%c0_1, %c0_2] : memref<32x16xbf16, #tpu.memory_space<vmem>>, vector<32x16xbf16>
    %cst = arith.constant dense<0.000000e+00> : vector<8x16xf32>
    %2 = tpu.matmul %0, %1, %cst {dimension_numbers = #tpu.dot_dimension_numbers<[1], [0], [0], [1], [0, 0, 1, 1], [], []>} : vector<8x32xbf16>, vector<32x16xbf16>, vector<8x16xf32> -> vector<8x16xf32>
    %c0_3 = arith.constant 0 : index
    %c0_4 = arith.constant 0 : index
    %3 = vector.load %arg3[%c0_3, %c0_4] : memref<1x16xf32, #tpu.memory_space<vmem>>, vector<1x16xf32>
    %4 = vector.broadcast %3 : vector<1x16xf32> to vector<8x16xf32>
    %5 = arith.addf %2, %4 : vector<8x16xf32>
    %cst_5 = arith.constant 0.000000e+00 : f32
    %6 = vector.broadcast %cst_5 : f32 to vector<8x16xf32>
    %7 = arith.maximumf %5, %6 : vector<8x16xf32>
    %8 = arith.truncf %7 : vector<8x16xf32> to vector<8x16xbf16>
    %c0_6 = arith.constant 0 : index
    %c0_7 = arith.constant 0 : index
    %9 = vector.load %arg4[%c0_6, %c0_7] : memref<16x8xbf16, #tpu.memory_space<vmem>>, vector<16x8xbf16>
    %cst_8 = arith.constant dense<0.000000e+00> : vector<8x8xf32>
    %10 = tpu.matmul %8, %9, %cst_8 {dimension_numbers = #tpu.dot_dimension_numbers<[1], [0], [0], [1], [0, 0, 1, 1], [], []>} : vector<8x16xbf16>, vector<16x8xbf16>, vector<8x8xf32> -> vector<8x8xf32>
    %c0_9 = arith.constant 0 : index
    %c0_10 = arith.constant 0 : index
    %11 = vector.load %arg5[%c0_9, %c0_10] : memref<1x8xf32, #tpu.memory_space<vmem>>, vector<1x8xf32>
    %12 = vector.broadcast %11 : vector<1x8xf32> to vector<8x8xf32>
    %13 = arith.addf %10, %12 : vector<8x8xf32>
    %cst_11 = arith.constant 0.000000e+00 : f32
    %14 = vector.broadcast %cst_11 : f32 to vector<8x8xf32>
    %15 = arith.maximumf %13, %14 : vector<8x8xf32>
    %16 = arith.truncf %15 : vector<8x8xf32> to vector<8x8xbf16>
    %c0_12 = arith.constant 0 : index
    %c0_13 = arith.constant 0 : index
    %17 = vector.load %arg6[%c0_12, %c0_13] : memref<8x1xbf16, #tpu.memory_space<vmem>>, vector<8x1xbf16>
    %cst_14 = arith.constant dense<0.000000e+00> : vector<8x1xf32>
    %18 = tpu.matmul %16, %17, %cst_14 {dimension_numbers = #tpu.dot_dimension_numbers<[1], [0], [0], [1], [0, 0, 1, 1], [], []>} : vector<8x8xbf16>, vector<8x1xbf16>, vector<8x1xf32> -> vector<8x1xf32>
    %c0_15 = arith.constant 0 : index
    %c0_16 = arith.constant 0 : index
    %19 = vector.load %arg7[%c0_15, %c0_16] : memref<1x1xf32, #tpu.memory_space<vmem>>, vector<1x1xf32>
    %20 = vector.broadcast %19 : vector<1x1xf32> to vector<8x1xf32>
    %21 = arith.addf %18, %20 : vector<8x1xf32>
    %c0_17 = arith.constant 0 : index
    %c0_18 = arith.constant 0 : index
    %22 = vector.load %arg8[%c0_17, %c0_18] : memref<8x1xf32, #tpu.memory_space<vmem>>, vector<8x1xf32>
    tpu.vector_store %arg8[%c0_17, %c0_18], %21 {strides = array<i32>} : memref<8x1xf32, #tpu.memory_space<vmem>>, vector<8x1xf32>,
    return
  }
  func.func @transform_0(%arg0: i32) -> (i32, i32) {
    %c0_i32 = arith.constant 0 : i32
    %c0_i32_0 = arith.constant 0 : i32
    return %arg0, %c0_i32 : i32, i32
  }
  func.func @transform_1(%arg0: i32) -> (i32, i32) {
    %c0_i32 = arith.constant 0 : i32
    %c0_i32_0 = arith.constant 0 : i32
    %c0_i32_1 = arith.constant 0 : i32
    return %c0_i32, %c0_i32_0 : i32, i32
  }
  func.func @transform_2(%arg0: i32) -> (i32, i32) {
    %c0_i32 = arith.constant 0 : i32
    %c0_i32_0 = arith.constant 0 : i32
    %c0_i32_1 = arith.constant 0 : i32
    return %c0_i32, %c0_i32_0 : i32, i32
  }
  func.func @transform_3(%arg0: i32) -> (i32, i32) {
    %c0_i32 = arith.constant 0 : i32
    %c0_i32_0 = arith.constant 0 : i32
    %c0_i32_1 = arith.constant 0 : i32
    return %c0_i32, %c0_i32_0 : i32, i32
  }
  func.func @transform_4(%arg0: i32) -> (i32, i32) {
    %c0_i32 = arith.constant 0 : i32
    %c0_i32_0 = arith.constant 0 : i32
    %c0_i32_1 = arith.constant 0 : i32
    return %c0_i32, %c0_i32_0 : i32, i32
  }
  func.func @transform_5(%arg0: i32) -> (i32, i32) {
    %c0_i32 = arith.constant 0 : i32
    %c0_i32_0 = arith.constant 0 : i32
    %c0_i32_1 = arith.constant 0 : i32
    return %c0_i32, %c0_i32_0 : i32, i32
  }
  func.func @transform_6(%arg0: i32) -> (i32, i32) {
    %c0_i32 = arith.constant 0 : i32
    %c0_i32_0 = arith.constant 0 : i32
    %c0_i32_1 = arith.constant 0 : i32
    return %c0_i32, %c0_i32_0 : i32, i32
  }
  func.func @transform_7(%arg0: i32) -> (i32, i32) {
    %c0_i32 = arith.constant 0 : i32
    %c0_i32_0 = arith.constant 0 : i32
    return %arg0, %c0_i32 : i32, i32
  }
}

</mosaic_0001>

<llo_original>
// kernel: tpu_custom_call.1
$region0: #{tpu_custom_call.1}
  #allocation0 [shape = 'u32[]', space=smem, size = 0x4, offset = 0x4, fixed_abs, tag = 'smem constant byte address 0x4 - core index']
  #allocation1 [shape = 'u32[144,128]{1,0:T(1,128)}', space=vmem, size = 0x12000, scoped, tag = 'internal scratch']
  #allocation2 [shape = 'f32[1,1]{1,0:T(1,128)S(1)}', space=vmem, size = 0x200, scoped, tag = 'scoped memory for tpu_custom_call.1']
  %s0 = inlined_call_operand.vmem [shape: bf16[8,32], index: 0, kind: input, shape index: {}]
  %s1 = inlined_call_operand.vmem [shape: bf16[32,16], index: 1, kind: input, shape index: {}]
  %s2 = inlined_call_operand.vmem [shape: f32[1,16], index: 2, kind: input, shape index: {}]
  %s3 = inlined_call_operand.vmem [shape: bf16[16,8], index: 3, kind: input, shape index: {}]
  %s4 = inlined_call_operand.vmem [shape: f32[1,8], index: 4, kind: input, shape index: {}]
  %s5 = inlined_call_operand.vmem [shape: bf16[8,1], index: 5, kind: input, shape index: {}]
  %s6 = inlined_call_operand.<no memory space> [shape: f32[1,1], index: 6, kind: input, shape index: {}]
  %s7 = inlined_call_operand.vmem [shape: f32[8,1], index: 7, kind: output, shape index: {}]
  %s8 = sld [smem:[#allocation0]]
  $region38: #{tpu_custom_call.1} parent=0
    _
  %s10 = ssub.s32 1, %s8
  %s11 = scalar_select 0, %s10, %s8
  %v12 = vstv %s6
  %13 = vst [vmem:[#allocation2] sm:$0x1] %v12
  // Predicated region
  $region2: #{tpu_custom_call.1} parent=0 // pred_check
    _
  $region3: #{tpu_custom_call.1} parent=0 // pred_check_branch
    %15 = sbr.rel (0) target = $region5
  $region4: #{tpu_custom_call.1} parent=0 // pred_region
    _
  $region5: #{tpu_custom_call.1} parent=0 // pred_fallthru
    _
  // Predicated region
  $region6: #{tpu_custom_call.1} parent=0 // pred_check
    _
  $region7: #{tpu_custom_call.1} parent=0 // pred_check_branch
    %17 = sbr.rel (0) target = $region9
  $region8: #{tpu_custom_call.1} parent=0 // pred_region
    _
  $region9: #{tpu_custom_call.1} parent=0 // pred_fallthru
    _
  // Predicated region
  $region10: #{tpu_custom_call.1} parent=0 // pred_check
    _
  $region11: #{tpu_custom_call.1} parent=0 // pred_check_branch
    %19 = sbr.rel (0) target = $region13
  $region12: #{tpu_custom_call.1} parent=0 // pred_region
    _
  $region13: #{tpu_custom_call.1} parent=0 // pred_fallthru
    _
  // Predicated region
  $region14: #{tpu_custom_call.1} parent=0 // pred_check
    _
  $region15: #{tpu_custom_call.1} parent=0 // pred_check_branch
    %21 = sbr.rel (0) target = $region17
  $region16: #{tpu_custom_call.1} parent=0 // pred_region
    _
  $region17: #{tpu_custom_call.1} parent=0 // pred_fallthru
    _
  // Predicated region
  $region18: #{tpu_custom_call.1} parent=0 // pred_check
    _
  $region19: #{tpu_custom_call.1} parent=0 // pred_check_branch
    %23 = sbr.rel (0) target = $region21
  $region20: #{tpu_custom_call.1} parent=0 // pred_region
    _
  $region21: #{tpu_custom_call.1} parent=0 // pred_fallthru
    _
  // Predicated region
  $region22: #{tpu_custom_call.1} parent=0 // pred_check
    _
  $region23: #{tpu_custom_call.1} parent=0 // pred_check_branch
    %25 = sbr.rel (0) target = $region25
  $region24: #{tpu_custom_call.1} parent=0 // pred_region
    _
  $region25: #{tpu_custom_call.1} parent=0 // pred_fallthru
    _
  // Predicated region
  $region26: #{tpu_custom_call.1} parent=0 // pred_check
    _
  $region27: #{tpu_custom_call.1} parent=0 // pred_check_branch
    %27 = sbr.rel (0) target = $region29
  $region28: #{tpu_custom_call.1} parent=0 // pred_region
    _
  $region29: #{tpu_custom_call.1} parent=0 // pred_fallthru
    _
  %v29 = vld [vmem:[%s0] sm:$0xf]
  %v30 = vld [vmem:[%s1] sm:$0xf]
  %v31 = vld [vmem:[%s1 + $0x4] sm:$0xf]
  %v32 = vld [vmem:[%s1 + $0x8] sm:$0xf]
  %v33 = vld [vmem:[%s1 + $0xc] sm:$0xf]
  %v34 = vld [vmem:[%s2] sm:$0x1]
  %v36 = vlaneseq
  %v37 = vshrl.u32 %v36, 7
  %v38 = vsub.s32 0, %v37
  %v39 = vrot.slane %v34, %v38
  %v45 = vunpack.c.l.b16 %v30
  %v46 = vunpack.c.l.b16 %v31
  %v47 = vunpack.c.l.b16 %v32
  %v48 = vunpack.c.l.b16 %v33
  %v49 = vpack.c.b16 %v46, %v45
  %v50 = vpack.c.b16 %v48, %v47
  %vm53 = vcmask 261120
  %v55 = vsel %vm53, %v29, 0
  %57 = vmatprep.subr.bf16.mxu0 0
  %58 = vmatpush1.bf16.msra.mxu0 %v49
  %59 = vmatprep.subr.bf16.mxu0 0
  %60 = vmatpush1.bf16.msra.mxu0 %v50
  %61 = vmatprep.subr.bf16.mxu0 0
  %62 = vmatpush1.bf16.msra.mxu0 0
  %63 = vmatprep.subr.bf16.mxu0 0
  %64 = vmatpush1.bf16.msra.mxu0 0
  %65 = vmatprep.subr.bf16.mxu0 0
  %66 = vmatpush1.bf16.msra.mxu0 0
  %67 = vmatprep.subr.bf16.mxu0 0
  %68 = vmatpush1.bf16.msra.mxu0 0
  %69 = vmatprep.subr.bf16.mxu0 0
  %70 = vmatpush1.bf16.msra.mxu0 0
  %71 = vmatprep.subr.bf16.mxu0 0
  %72 = vmatpush1.bf16.msra.mxu0 0
  %73 = vmatprep.subr.bf16.mxu0 0
  %74 = vmatpush1.bf16.msra.mxu0 0
  %75 = vmatprep.subr.bf16.mxu0 0
  %76 = vmatpush1.bf16.msra.mxu0 0
  %77 = vmatprep.subr.bf16.mxu0 0
  %78 = vmatpush1.bf16.msra.mxu0 0
  %79 = vmatprep.subr.bf16.mxu0 0
  %80 = vmatpush1.bf16.msra.mxu0 0
  %81 = vmatprep.subr.bf16.mxu0 0
  %82 = vmatpush1.bf16.msra.mxu0 0
  %83 = vmatprep.subr.bf16.mxu0 0
  %84 = vmatpush1.bf16.msra.mxu0 0
  %85 = vmatprep.subr.bf16.mxu0 0
  %86 = vmatpush1.bf16.msra.mxu0 0
  %87 = vmatprep.subr.bf16.mxu0 0
  %88 = vmatpush1.bf16.msra.mxu0 0
  %89 = vmatprep.mubr.bf16.mxu0 0
  %90 = vmatmul.mubr.bf16.gmra.mrb[0].mxu0 %v55
  %v91 = vpop.f32.mrb[0].mxu0
  %v92 = vadd.f32 %v39, %v91
  %v93 = vpop.f32.mrb[0].mxu0
  %v94 = vpop.f32.mrb[0].mxu0
  %v95 = vpop.f32.mrb[0].mxu0
  %96 = vdwg.mxu0
  %v97 = vmax.f32 %v92, 0.0
  %v98 = vpack.c.bf16 %v97, %v97
  %v99 = vld [vmem:[%s3] sm:$0xf]
  %v100 = vld [vmem:[%s3 + $0x4] sm:$0xf]
  %v101 = vld [vmem:[%s4] sm:$0x1]
  %v103 = vlaneseq
  %v104 = vshrl.u32 %v103, 7
  %v105 = vsub.s32 0, %v104
  %v106 = vrot.slane %v101, %v105
  %v110 = vunpack.c.l.b16 %v99
  %v111 = vunpack.c.l.b16 %v100
  %v112 = vpack.c.b16 %v111, %v110
  %vm114 = vcmask 130048
  %v116 = vsel %vm114, %v98, 0
  %118 = vmatprep.subr.bf16.mxu0 0
  %119 = vmatpush1.bf16.msra.mxu0 %v112
  %120 = vmatprep.subr.bf16.mxu0 0
  %121 = vmatpush1.bf16.msra.mxu0 0
  %122 = vmatprep.subr.bf16.mxu0 0
  %123 = vmatpush1.bf16.msra.mxu0 0
  %124 = vmatprep.subr.bf16.mxu0 0
  %125 = vmatpush1.bf16.msra.mxu0 0
  %126 = vmatprep.subr.bf16.mxu0 0
  %127 = vmatpush1.bf16.msra.mxu0 0
  %128 = vmatprep.subr.bf16.mxu0 0
  %129 = vmatpush1.bf16.msra.mxu0 0
  %130 = vmatprep.subr.bf16.mxu0 0
  %131 = vmatpush1.bf16.msra.mxu0 0
  %132 = vmatprep.subr.bf16.mxu0 0
  %133 = vmatpush1.bf16.msra.mxu0 0
  %134 = vmatprep.subr.bf16.mxu0 0
  %135 = vmatpush1.bf16.msra.mxu0 0
  %136 = vmatprep.subr.bf16.mxu0 0
  %137 = vmatpush1.bf16.msra.mxu0 0
  %138 = vmatprep.subr.bf16.mxu0 0
  %139 = vmatpush1.bf16.msra.mxu0 0
  %140 = vmatprep.subr.bf16.mxu0 0
  %141 = vmatpush1.bf16.msra.mxu0 0
  %142 = vmatprep.subr.bf16.mxu0 0
  %143 = vmatpush1.bf16.msra.mxu0 0
  %144 = vmatprep.subr.bf16.mxu0 0
  %145 = vmatpush1.bf16.msra.mxu0 0
  %146 = vmatprep.subr.bf16.mxu0 0
  %147 = vmatpush1.bf16.msra.mxu0 0
  %148 = vmatprep.subr.bf16.mxu0 0
  %149 = vmatpush1.bf16.msra.mxu0 0
  %150 = vmatprep.mubr.bf16.mxu0 0
  %151 = vmatmul.mubr.bf16.gmra.mrb[0].mxu0 %v116
  %v152 = vpop.f32.mrb[0].mxu0
  %v153 = vadd.f32 %v106, %v152
  %v154 = vpop.f32.mrb[0].mxu0
  %v155 = vpop.f32.mrb[0].mxu0
  %v156 = vpop.f32.mrb[0].mxu0
  %157 = vdwg.mxu0
  %v158 = vmax.f32 %v153, 0.0
  %v159 = vpack.c.bf16 %v158, %v158
  %v160 = vld [vmem:[%s5] sm:$0xf]
  %v161 = vld [vmem:[#allocation2] sm:$0x1]
  %v163 = vlaneseq
  %v164 = vshrl.u32 %v163, 7
  %v165 = vsub.s32 0, %v164
  %v166 = vrot.slane %v161, %v165
  %vm168 = vcmask 64512
  %v170 = vsel %vm168, %v159, 0
  %vm172 = vcmask 1043456
  %v174 = vsel %vm172, %v160, 0
  %176 = vmatprep.subr.bf16.mxu0 0
  %177 = vmatpush1.bf16.msra.mxu0 %v174
  %178 = vmatprep.subr.bf16.mxu0 0
  %179 = vmatpush1.bf16.msra.mxu0 0
  %180 = vmatprep.subr.bf16.mxu0 0
  %181 = vmatpush1.bf16.msra.mxu0 0
  %182 = vmatprep.subr.bf16.mxu0 0
  %183 = vmatpush1.bf16.msra.mxu0 0
  %184 = vmatprep.subr.bf16.mxu0 0
  %185 = vmatpush1.bf16.msra.mxu0 0
  %186 = vmatprep.subr.bf16.mxu0 0
  %187 = vmatpush1.bf16.msra.mxu0 0
  %188 = vmatprep.subr.bf16.mxu0 0
  %189 = vmatpush1.bf16.msra.mxu0 0
  %190 = vmatprep.subr.bf16.mxu0 0
  %191 = vmatpush1.bf16.msra.mxu0 0
  %192 = vmatprep.subr.bf16.mxu0 0
  %193 = vmatpush1.bf16.msra.mxu0 0
  %194 = vmatprep.subr.bf16.mxu0 0
  %195 = vmatpush1.bf16.msra.mxu0 0
  %196 = vmatprep.subr.bf16.mxu0 0
  %197 = vmatpush1.bf16.msra.mxu0 0
  %198 = vmatprep.subr.bf16.mxu0 0
  %199 = vmatpush1.bf16.msra.mxu0 0
  %200 = vmatprep.subr.bf16.mxu0 0
  %201 = vmatpush1.bf16.msra.mxu0 0
  %202 = vmatprep.subr.bf16.mxu0 0
  %203 = vmatpush1.bf16.msra.mxu0 0
  %204 = vmatprep.subr.bf16.mxu0 0
  %205 = vmatpush1.bf16.msra.mxu0 0
  %206 = vmatprep.subr.bf16.mxu0 0
  %207 = vmatpush1.bf16.msra.mxu0 0
  %208 = vmatprep.mubr.bf16.mxu0 0
  %209 = vmatmul.mubr.bf16.gmra.mrb[0].mxu0 %v170
  %v210 = vpop.f32.mrb[0].mxu0
  %v211 = vadd.f32 %v166, %v210
  %v212 = vpop.f32.mrb[0].mxu0
  %v213 = vpop.f32.mrb[0].mxu0
  %v214 = vpop.f32.mrb[0].mxu0
  %215 = vdwg.mxu0
  %vm216 = vcmask 7168
  %217 = vst.msk [vmem:[%s7] sm:$0xff] %vm216, %v211
  // Predicated region
  $region30: #{tpu_custom_call.1} parent=0 // pred_check
    _
  $region31: #{tpu_custom_call.1} parent=0 // pred_check_branch
    %219 = sbr.rel (0) target = $region33
  $region32: #{tpu_custom_call.1} parent=0 // pred_region
    _
  $region33: #{tpu_custom_call.1} parent=0 // pred_fallthru
    _
  // Predicated region
  $region34: #{tpu_custom_call.1} parent=0 // pred_check
    _
  $region35: #{tpu_custom_call.1} parent=0 // pred_check_branch
    %221 = sbr.rel (0) target = $region37
  $region36: #{tpu_custom_call.1} parent=0 // pred_region
    _
  $region37: #{tpu_custom_call.1} parent=0 // pred_fallthru
    _

</llo_original>
